<compile_context>
chip_gen: v6e
topology: v6e:2x2x1
jax: 0.10.0
libtpu: 0.0.40
codegen_flags: <defaults>
</compile_context>

<pallas_src>
import jax
import jax.numpy as jnp
from jax.experimental import pallas as pl
from jax.experimental.pallas import tpu as pltpu


def _prenorm_kernel(x_ref, g_ref, o_ref):
    # x_ref: (TB, C, TN) tile; g_ref: (1, C, 1) gain with sqrt(C) pre-folded.
    x = x_ref[...]
    xf = x.astype(jnp.float32)
    sq_sum = jnp.sum(xf * xf, axis=1, keepdims=True)           # (TB, 1, TN)
    # clamp_min(||x||, 1e-12)  <=>  rsqrt(max(sum(x^2), 1e-24))
    inv = jax.lax.rsqrt(jnp.maximum(sq_sum, 1e-24))             # EUP slot, cheap
    g = g_ref[...].astype(jnp.float32)                          # (1, C, 1)
    if o_ref.dtype == jnp.float32:
        o_ref[...] = xf * (inv * g)
    else:
        # bf16/fp16 path: keep the reduction in f32 but do the final scale pass in
        # the native dtype (halves VPU op count / vreg traffic on the second pass).
        scale = (inv * g).astype(x.dtype)
        o_ref[...] = x * scale


def _ceil_to(v, m):
    return ((v + m - 1) // m) * m


def _pick_tiles(B, C, N, itemsize, target_bytes=2 * 1024 * 1024):
    """Choose (tb, tn): lane tile (multiple of 128 or full N) and batch tile so a
    block holds ~target_bytes of input-dtype data. Dtype-aware; no small-C cap."""
    # Keep each per-channel-row strided DMA burst >= ~2 KiB (short bursts underfeed HBM).
    tn_min = max(128, _ceil_to(max(2048 // itemsize, 1), 128))
    if N <= tn_min:
        tn = N                                     # full extent: always a legal block dim
    else:
        tn = (target_bytes // (max(C, 1) * itemsize)) // 128 * 128
        tn = max(tn_min, min(tn, (N // 128) * 128))
    # Batch tiling: when C*tn is small (small C / short sequences), grow along B.
    blk_bytes = max(C, 1) * tn * itemsize
    tb = int(min(B, max(1, target_bytes // max(blk_bytes, 1))))
    # Keep at least 2 grid steps when possible (v7x has 2 TCs; also gives the
    # auto-pipeliner something to overlap).
    if pl.cdiv(B, tb) * pl.cdiv(N, tn) < 2:
        if B > 1:
            tb = pl.cdiv(B, 2)
        elif tn > 256 and N > 256:
            tn = max(128, (tn // 2) // 128 * 128)
    return tb, tn


def prenorm(x, g, fn=None, block_n=None, block_b=None):
    """x: (B, C, N), g: (1, C, 1). Returns fn(rms_norm(x)); fn defaults to identity."""
    B, C, N = x.shape
    itemsize = jnp.dtype(x.dtype).itemsize

    # Fold sqrt(C) into the gain once (kernel then does a single fused scale).
    g_scaled = g.astype(jnp.float32) * (C ** 0.5)

    tb, tn = _pick_tiles(B, C, N, itemsize)
    if block_n is not None:
        tn = int(block_n)
    if block_b is not None:
        tb = int(block_b)
    grid = (pl.cdiv(B, tb), pl.cdiv(N, tn))

    # VMEM budget: 2x in + 2x out double buffers (input dtype) + f32 temporaries.
    tile_in = tb * C * tn * itemsize
    tile_f32 = tb * C * tn * 4
    vmem_limit = min(max(4 * tile_in + 4 * tile_f32 + (2 << 20), 32 << 20), 48 << 20)

    cost = pl.CostEstimate(
        flops=3 * B * C * N,                  # square, reduce-add, scale
        transcendentals=B * N,                # one rsqrt per column
        bytes_accessed=2 * B * C * N * itemsize + C * 4,
    )

    normed = pl.pallas_call(
        _prenorm_kernel,
        out_shape=jax.ShapeDtypeStruct((B, C, N), x.dtype),
        grid=grid,
        in_specs=[
            pl.BlockSpec((tb, C, tn), lambda b, n: (b, 0, n)),   # per-(batch, seq) tile
            pl.BlockSpec((1, C, 1), lambda b, n: (0, 0, 0)),     # gain, shared
        ],
        out_specs=pl.BlockSpec((tb, C, tn), lambda b, n: (b, 0, n)),
        compiler_params=pltpu.CompilerParams(
            dimension_semantics=("parallel", "parallel"),
            vmem_limit_bytes=int(vmem_limit),
        ),
        cost_estimate=cost,
    )(x, g_scaled)

    if fn is None:
        return normed
    return fn(normed)


def _reference(x, g):
    xf = x.astype(jnp.float32)
    c = x.shape[1]
    norm = jnp.sqrt(jnp.sum(xf * xf, axis=1, keepdims=True))
    denom = jnp.maximum(norm, 1e-12)
    return ((xf / denom) * g.astype(jnp.float32) * (c ** 0.5)).astype(x.dtype)


if __name__ == "__main__":
    key = jax.random.PRNGKey(0)
    kx, kg, kx2, kx3 = jax.random.split(key, 4)

    # RMSNorm.__init__ sets g = ones(1, dim, 1); perturb deterministically so the
    # gain actually matters in the tests.
    C = 8
    g = jnp.ones((1, C, 1), dtype=jnp.float32) + 0.1 * jax.random.normal(
        kg, (1, C, 1), dtype=jnp.float32
    )

    # Test 1: divisible shapes, f32 (batch tiling path).
    B, N = 2, 128
    x = jax.random.normal(kx, (B, C, N), dtype=jnp.float32)
    out = jax.block_until_ready(prenorm(x, g))          # fn = identity
    ref = _reference(x, g)
    assert out.shape == (B, C, N), out.shape
    assert jnp.allclose(out, ref, atol=1e-4, rtol=1e-4), "mismatch vs reference (f32)"

    # Test 2: N not a multiple of the lane tile — exercises the unpadded edge block.
    B2, N2 = 3, 200
    x2 = jax.random.normal(kx2, (B2, C, N2), dtype=jnp.float32)
    out2 = jax.block_until_ready(prenorm(x2, g, block_n=128))
    ref2 = _reference(x2, g)
    assert out2.shape == (B2, C, N2), out2.shape
    assert jnp.allclose(out2, ref2, atol=1e-4, rtol=1e-4), "mismatch vs reference (edge)"

    # Test 3: bf16 input — exercises the native-dtype final-scale path + edge block.
    x3 = jax.random.normal(kx3, (B2, C, N2), dtype=jnp.float32).astype(jnp.bfloat16)
    out3 = jax.block_until_ready(prenorm(x3, g, block_n=128))
    ref3 = _reference(x3, g)
    assert out3.shape == (B2, C, N2), out3.shape
    assert jnp.allclose(
        out3.astype(jnp.float32), ref3.astype(jnp.float32), atol=5e-2, rtol=5e-2
    ), "mismatch vs reference (bf16)"

    print("KERNEL_OK")
</pallas_src>

<mosaic_0001>
module attributes {stable_mosaic.version = 11 : i64} {
  func.func @_prenorm_kernel(%arg0: i32, %arg1: i32, %arg2: memref<1x8x128xf32, #tpu.memory_space<vmem>>, %arg3: memref<1x8x1xf32, #tpu.memory_space<vmem>>, %arg4: memref<1x8x128xf32, #tpu.memory_space<vmem>>) attributes {dimension_semantics = [#tpu.dimension_semantics<parallel>, #tpu.dimension_semantics<parallel>], iteration_bounds = array<i64: 2, 1>, scalar_prefetch = 0 : i64, scratch_operands = 0 : i64, tpu.core_type = #tpu.core_type<tc>, window_params = [{transform_indices = @transform_0, window_bounds = array<i64: 1, 8, 128>}, {pipeline_mode = #tpu.pipeline_mode<synchronous>, transform_indices = @transform_1, window_bounds = array<i64: 1, 8, 1>}, {transform_indices = @transform_2, window_bounds = array<i64: 1, 8, 128>}]} {
    %c0 = arith.constant 0 : index
    %c0_0 = arith.constant 0 : index
    %c0_1 = arith.constant 0 : index
    %0 = vector.load %arg2[%c0, %c0_0, %c0_1] : memref<1x8x128xf32, #tpu.memory_space<vmem>>, vector<1x8x128xf32>
    %1 = arith.mulf %0, %0 : vector<1x8x128xf32>
    %cst = arith.constant dense<0.000000e+00> : vector<1x128xf32>
    %2 = vector.multi_reduction <add>, %1, %cst [1] : vector<1x8x128xf32> to vector<1x128xf32>
    %3 = vector.shape_cast %2 : vector<1x128xf32> to vector<1x1x128xf32>
    %cst_2 = arith.constant 1.000000e-24 : f32
    %4 = vector.broadcast %cst_2 : f32 to vector<1x1x128xf32>
    %5 = arith.maximumf %3, %4 : vector<1x1x128xf32>
    %6 = math.rsqrt %5 : vector<1x1x128xf32>
    %c0_3 = arith.constant 0 : index
    %c0_4 = arith.constant 0 : index
    %c0_5 = arith.constant 0 : index
    %7 = vector.load %arg3[%c0_3, %c0_4, %c0_5] : memref<1x8x1xf32, #tpu.memory_space<vmem>>, vector<1x8x1xf32>
    %8 = vector.broadcast %6 : vector<1x1x128xf32> to vector<1x8x128xf32>
    %9 = vector.broadcast %7 : vector<1x8x1xf32> to vector<1x8x128xf32>
    %10 = arith.mulf %8, %9 : vector<1x8x128xf32>
    %11 = arith.mulf %0, %10 : vector<1x8x128xf32>
    %c0_6 = arith.constant 0 : index
    %c0_7 = arith.constant 0 : index
    %c0_8 = arith.constant 0 : index
    %12 = vector.load %arg4[%c0_6, %c0_7, %c0_8] : memref<1x8x128xf32, #tpu.memory_space<vmem>>, vector<1x8x128xf32>
    tpu.vector_store %arg4[%c0_6, %c0_7, %c0_8], %11 {strides = array<i32>} : memref<1x8x128xf32, #tpu.memory_space<vmem>>, vector<1x8x128xf32>,
    return
  }
  func.func @transform_0(%arg0: i32, %arg1: i32) -> (i32, i32, i32) {
    %c0_i32 = arith.constant 0 : i32
    %c0_i32_0 = arith.constant 0 : i32
    return %arg0, %c0_i32, %arg1 : i32, i32, i32
  }
  func.func @transform_1(%arg0: i32, %arg1: i32) -> (i32, i32, i32) {
    %c0_i32 = arith.constant 0 : i32
    %c0_i32_0 = arith.constant 0 : i32
    %c0_i32_1 = arith.constant 0 : i32
    %c0_i32_2 = arith.constant 0 : i32
    return %c0_i32, %c0_i32_0, %c0_i32_1 : i32, i32, i32
  }
  func.func @transform_2(%arg0: i32, %arg1: i32) -> (i32, i32, i32) {
    %c0_i32 = arith.constant 0 : i32
    %c0_i32_0 = arith.constant 0 : i32
    return %arg0, %c0_i32, %arg1 : i32, i32, i32
  }
}

</mosaic_0001>

<llo_original>
// kernel: tpu_custom_call.1
$region0: #{tpu_custom_call.1}
  #allocation0 [shape = 'u32[]', space=smem, size = 0x4, offset = 0x4, fixed_abs, tag = 'smem constant byte address 0x4 - core index']
  #allocation1 [shape = 'u32[144,128]{1,0:T(1,128)}', space=vmem, size = 0x12000, scoped, tag = 'internal scratch']
  %s0 = inlined_call_operand.hbm [shape: f32[2,8,128], index: 0, kind: input, shape index: {}]
  %s1 = inlined_call_operand.vmem [shape: f32[1,8,1], index: 1, kind: input, shape index: {}]
  %s2 = inlined_call_operand.hbm [shape: f32[2,8,128], index: 2, kind: output, shape index: {}]
  %s3 = sld [smem:[#allocation0]]
  $region45: #{tpu_custom_call.1} parent=0
    _
  %s5 = ssub.s32 1, %s3
  %s6 = scalar_select 0, %s5, %s3
  $region1: #{tpu_custom_call.1} parent=0
    #allocation2 [shape = 'u8[8192]{0}', space=vmem, size = 0x2000, scoped, tag = 'input window, operand 0']
    #allocation3 [shape = 's32[2]{0}', space=sflag, size = 0x8, scoped, tag = 'scoped memory for tpu_custom_call.1']
    #allocation4 [shape = 's32[2]{0}', space=sflag, size = 0x8, scoped, tag = 'scoped memory for tpu_custom_call.1']
    #allocation5 [shape = 'u8[8192]{0}', space=vmem, size = 0x2000, scoped, tag = 'output window, operand 0']
    %7 = vsyncpa [#allocation3], 0
    %s8 = scalar_lea.sflag [#allocation3], 1
    %9 = vsyncpa %s8, 0
    %10 = vsyncpa [#allocation4], 0
    %s11 = scalar_lea.sflag [#allocation4], 1
    %12 = vsyncpa %s11, 0
    loop: start=0, step=1, limit=4
    $region2: #{tpu_custom_call.1} parent=1 // loop_pre_header
      _
    $region3: #{tpu_custom_call.1} parent=1 // loop_header
      %s14 = sphi 0, %s18
      %p15 = scmp.ge.s32.totalorder %s14, 4
      %s21 = sphi 0, %s33
      %s22 = sphi 0, %s29
      %s23 = sphi 0, %s21
      %s24 = sphi 0, %s22
      %s25 = sphi 0, %s23
      %s26 = sphi 0, %s24
      %s38 = sphi 0, %s40
      %s41 = sphi 0, %s38
      %s42 = sphi 0, %s41
      %s58 = sphi 0, %s42
      %s62 = sphi 0, %s62
      %s64 = sphi 0, %s62
      %s65 = sphi 0, %s64
      %s79 = sphi 0, %s65
      %s87 = sphi 0, %s89
      %s90 = sphi 0, %s87
      %s91 = sphi 0, %s90
      %s107 = sphi 0, %s91
    $region4: #{tpu_custom_call.1} parent=1 // loop_header_branch
      %17 = sbr.rel (%p15) target = $region8
    $region5: #{tpu_custom_call.1} parent=1 // loop_body
      %s19 = ssub.s32 %s14, 1
      %s20 = ssub.s32 %s14, 2
      %s27 = sadd.s32 1, %s22
      %p28 = scmp.ge.s32.totalorder %s27, 1
      %s29 = scalar_select %p28, 0, %s27
      %s30 = sadd.s32 1, %s21
      %s31 = scalar_select %p28, %s30, %s21
      %p32 = scmp.ge.s32.totalorder %s31, 2
      %s33 = scalar_select %p32, 0, %s31
      %s34 = ssub.s32 %s21, %s33
      %s35 = ssub.s32 %s22, %s29
      %s36 = sor.u32 %s34, %s35
      %p37 = scmp.eq.s32.totalorder %s36, 0
      %s39 = sadd.s32 %s38, 1
      %s40 = scalar_select %p37, %s38, %s39
      %p43 = pneg %p37
      %p44 = scmp.eq.s32.totalorder %s14, 1
      %p45 = por %p43, %p44
      %p46 = scmp.ne.s32.totalorder %s38, %s41
      %p47 = scmp.eq.s32.totalorder %s14, 0
      %p48 = por %p46, %p47
      %p49 = scmp.ne.s32.totalorder %s38, %s41
      %p50 = scmp.eq.s32.totalorder %s19, 1
      %p51 = por %p49, %p50
      %p52 = scmp.ne.s32.totalorder %s41, %s42
      %p53 = scmp.eq.s32.totalorder %s19, 0
      %p54 = por %p52, %p53
      %p55 = scmp.ne.s32.totalorder %s41, %s42
      %p56 = scmp.eq.s32.totalorder %s20, 1
      %p57 = por %p55, %p56
      %p59 = scmp.ne.s32.totalorder %s42, %s58
      %p60 = scmp.eq.s32.totalorder %s20, 0
      %p61 = por %p59, %p60
      %s63 = sadd.s32 %s62, 1
      %p66 = scmp.eq.s32.totalorder %s14, 1
      %p67 = scmp.ne.s32.totalorder %s62, %s64
      %p68 = scmp.eq.s32.totalorder %s14, 0
      %p69 = por %p67, %p68
      %p70 = scmp.ne.s32.totalorder %s62, %s64
      %p71 = scmp.eq.s32.totalorder %s19, 1
      %p72 = por %p70, %p71
      %p73 = scmp.ne.s32.totalorder %s64, %s65
      %p74 = scmp.eq.s32.totalorder %s19, 0
      %p75 = por %p73, %p74
      %p76 = scmp.ne.s32.totalorder %s64, %s65
      %p77 = scmp.eq.s32.totalorder %s20, 1
      %p78 = por %p76, %p77
      %p80 = scmp.ne.s32.totalorder %s65, %s79
      %p81 = scmp.eq.s32.totalorder %s20, 0
      %p82 = por %p80, %p81
      %s83 = ssub.s32 %s21, %s33
      %s84 = ssub.s32 %s22, %s29
      %s85 = sor.u32 %s83, %s84
      %p86 = scmp.eq.s32.totalorder %s85, 0
      %s88 = sadd.s32 %s87, 1
      %s89 = scalar_select %p86, %s87, %s88
      %p92 = pneg %p86
      %p93 = scmp.eq.s32.totalorder %s14, 1
      %p94 = por %p92, %p93
      %p95 = scmp.ne.s32.totalorder %s87, %s90
      %p96 = scmp.eq.s32.totalorder %s14, 0
      %p97 = por %p95, %p96
      %p98 = scmp.ne.s32.totalorder %s87, %s90
      %p99 = scmp.eq.s32.totalorder %s19, 1
      %p100 = por %p98, %p99
      %p101 = scmp.ne.s32.totalorder %s90, %s91
      %p102 = scmp.eq.s32.totalorder %s19, 0
      %p103 = por %p101, %p102
      %p104 = scmp.ne.s32.totalorder %s90, %s91
      %p105 = scmp.eq.s32.totalorder %s20, 1
      %p106 = por %p104, %p105
      %p108 = scmp.ne.s32.totalorder %s91, %s107
      %p109 = scmp.eq.s32.totalorder %s20, 0
      %p110 = por %p108, %p109
      %p111 = scmp.le.s32.totalorder 1, %s14
      %p112 = scmp.lt.s32.totalorder %s14, 3
      %p113 = pnand %p111, %p112
      %p114 = pneg %p113
      // Predicated region
      $region9: #{tpu_custom_call.1} parent=5 // pred_check
        _
      $region10: #{tpu_custom_call.1} parent=5 // pred_check_branch
        %116 = sbr.rel (%p113) target = $region12
      $region11: #{tpu_custom_call.1} parent=5 // pred_region
        %s117 = ssub.s32 %s14, 1
        // Predicated region
        $region13: #{tpu_custom_call.1} parent=11 // pred_check
          %p118 = pneg %p75
        $region14: #{tpu_custom_call.1} parent=11 // pred_check_branch
          %120 = sbr.rel (%p118) target = $region16
        $region15: #{tpu_custom_call.1} parent=11 // pred_region
          _
        $region16: #{tpu_custom_call.1} parent=11 // pred_fallthru
          _
      $region12: #{tpu_custom_call.1} parent=5 // pred_fallthru
        _
      %p121 = scmp.lt.s32.totalorder %s14, 2
      // Predicated region
      $region17: #{tpu_custom_call.1} parent=5 // pred_check
        %p122 = pneg %p121
      $region18: #{tpu_custom_call.1} parent=5 // pred_check_branch
        %124 = sbr.rel (%p122) target = $region20
      $region19: #{tpu_custom_call.1} parent=5 // pred_region
        // Predicated region
        $region21: #{tpu_custom_call.1} parent=19 // pred_check
          %p125 = pneg %p48
        $region22: #{tpu_custom_call.1} parent=19 // pred_check_branch
          %127 = sbr.rel (%p125) target = $region24
        $region23: #{tpu_custom_call.1} parent=19 // pred_region
          %s128 = sand.u32 %s38, 1
          %s129 = scalar_lea.sflag [#allocation3], %s128
          %s130 = sand.u32 %s38, 1
          %s131 = smul.addr %s130, 8
          %s132 = scalar_lea.vmem [#allocation2], %s131
          %s134 = ssub.s32 128, 128
          %135 = vsyncadd %s129, %s134
          %s136 = sadd.s32 %s22, %s21
          %s137 = smul.addr %s136, 128
          %s138 = scalar_lea.hbm %s0, %s137
          %s140 = sshll.u32 %s132, 4
          %s141 = int_to_ptr.vmem [resolvable:$true] %s140
          %143 = dma.hbm_to_vmem [thread:$0]  %s138, 128, %s141, %s129
        $region24: #{tpu_custom_call.1} parent=19 // pred_fallthru
          _
      $region20: #{tpu_custom_call.1} parent=5 // pred_fallthru
        _
      %p144 = scmp.le.s32.totalorder 1, %s14
      %p145 = scmp.lt.s32.totalorder %s14, 3
      %p146 = pnand %p144, %p145
      %p147 = pneg %p146
      // Predicated region
      $region25: #{tpu_custom_call.1} parent=5 // pred_check
        _
      $region26: #{tpu_custom_call.1} parent=5 // pred_check_branch
        %149 = sbr.rel (%p146) target = $region28
      $region27: #{tpu_custom_call.1} parent=5 // pred_region
        %s150 = ssub.s32 %s14, 1
        %s151 = sand.u32 %s41, 1
        %s152 = scalar_lea.sflag [#allocation3], %s151
        %s153 = sand.u32 %s41, 1
        %s154 = smul.addr %s153, 8
        %s155 = scalar_lea.vmem [#allocation2], %s154
        // Predicated region
        $region29: #{tpu_custom_call.1} parent=27 // pred_check
          %p156 = pneg %p54
        $region30: #{tpu_custom_call.1} parent=27 // pred_check_branch
          %158 = sbr.rel (%p156) target = $region32
        $region31: #{tpu_custom_call.1} parent=27 // pred_region
          %159 = dma.done %s152, 128
        $region32: #{tpu_custom_call.1} parent=27 // pred_fallthru
          _
        %s160 = sand.u32 %s41, 1
        %s161 = scalar_lea.sflag [#allocation3], %s160
        %s162 = sand.u32 %s41, 1
        %s163 = smul.addr %s162, 8
        %s164 = scalar_lea.vmem [#allocation2], %s163
        %p165 = pneg %p54
        %p166 = pneg %p51
        %p167 = pneg %p75
        %p168 = pneg %p72
        %p169 = pneg %p103
        %p170 = pneg %p100
        %s171 = sand.u32 %s90, 1
        %s172 = scalar_lea.sflag [#allocation4], %s171
        %s173 = sand.u32 %s90, 1
        %s174 = smul.addr %s173, 8
        %s175 = scalar_lea.vmem [#allocation5], %s174
        %v176 = vld [vmem:[%s155] sm:$0xff]
        %v177 = vmul.f32 %v176, %v176
        %v178 = vrot.slane %v177, 4
        %v179 = vadd.f32 %v177, %v178
        %v180 = vrot.slane %v179, 2
        %v181 = vadd.f32 %v179, %v180
        %v182 = vrot.slane %v181, 1
        %v183 = vadd.f32 %v181, %v182
        %v184 = vmax.f32 %v183, 1e-24
        %v185 = vrsqrt.pop %v184
        %v186 = vld [vmem:[%s1] sm:$0xff]
        %188 = vset.pattern.permute.xlu0 0
        %189 = vperm.xlu0 %188, %v186
        %v190 = vpop.permute.xlu0 %189
        %v192 = vmul.f32 %v185, %v190
        %v193 = vmul.f32 %v176, %v192
        %194 = vst [vmem:[%s175] sm:$0xff] %v193
        %s195 = sand.u32 %s90, 1
        %s196 = scalar_lea.sflag [#allocation4], %s195
        %s197 = sand.u32 %s90, 1
        %s198 = smul.addr %s197, 8
        %s199 = scalar_lea.vmem [#allocation5], %s198
        // Predicated region
        $region33: #{tpu_custom_call.1} parent=27 // pred_check
          %p200 = pneg %p100
        $region34: #{tpu_custom_call.1} parent=27 // pred_check_branch
          %202 = sbr.rel (%p200) target = $region36
        $region35: #{tpu_custom_call.1} parent=27 // pred_region
          %s204 = ssub.s32 128, 128
          %205 = vsyncadd %s196, %s204
          %s206 = sadd.s32 %s24, %s23
          %s207 = smul.addr %s206, 128
          %s208 = scalar_lea.hbm %s2, %s207
          %s210 = sshll.u32 %s199, 4
          %s211 = int_to_ptr.vmem [resolvable:$true] %s210
          %213 = dma.vmem_to_hbm [thread:$0]  %s211, 128, %s208, %s196
        $region36: #{tpu_custom_call.1} parent=27 // pred_fallthru
          _
      $region28: #{tpu_custom_call.1} parent=5 // pred_fallthru
        _
      %p214 = scmp.le.s32.totalorder 2, %s14
      // Predicated region
      $region37: #{tpu_custom_call.1} parent=5 // pred_check
        %p215 = pneg %p214
      $region38: #{tpu_custom_call.1} parent=5 // pred_check_branch
        %217 = sbr.rel (%p215) target = $region40
      $region39: #{tpu_custom_call.1} parent=5 // pred_region
        %s218 = ssub.s32 %s14, 2
        // Predicated region
        $region41: #{tpu_custom_call.1} parent=39 // pred_check
          %p219 = pneg %p106
        $region42: #{tpu_custom_call.1} parent=39 // pred_check_branch
          %221 = sbr.rel (%p219) target = $region44
        $region43: #{tpu_custom_call.1} parent=39 // pred_region
          %s222 = sand.u32 %s91, 1
          %s223 = scalar_lea.sflag [#allocation4], %s222
          %s224 = sand.u32 %s91, 1
          %s225 = smul.addr %s224, 8
          %s226 = scalar_lea.vmem [#allocation5], %s225
          %227 = dma.done %s223, 128
        $region44: #{tpu_custom_call.1} parent=39 // pred_fallthru
          _
      $region40: #{tpu_custom_call.1} parent=5 // pred_fallthru
        _
    $region6: #{tpu_custom_call.1} parent=1 // loop_footer
      %s18 = sadd.s32 1, %s14
    $region7: #{tpu_custom_call.1} parent=1 // loop_footer_branch
      %13 = sbr.rel target = $region3
    $region8: #{tpu_custom_call.1} parent=1 // loop_exit
      _
    %228 = vsyncpa [#allocation3], 1
    %s229 = scalar_lea.sflag [#allocation3], 1
    %230 = vsyncpa %s229, 1
    %231 = vsyncpa [#allocation4], 1
    %s232 = scalar_lea.sflag [#allocation4], 1
    %233 = vsyncpa %s232, 1

</llo_original>
